<compile_context>
chip_gen: v5e
topology: v5e:2x2
jax: 0.10.0
libtpu: 0.0.40
codegen_flags: <defaults>
</compile_context>

<pallas_src>
import jax
import jax.numpy as jnp
from jax.experimental import pallas as pl
from jax.experimental.pallas import tpu as pltpu

HIDDEN = 64        # self._hidden_dim
INPUT_DIM = 2      # self._input_dim
OUTPUT_DIM = 2     # self._output_dim
OUT_PAD = 128      # lane-dense FC output width (sliced back in wrapper)


# ----------------------------- Pallas kernel ------------------------------- #

def _lstm_fc_kernel(x_ref, wih_ref, bias_ref, whh_ref, wfc_ref, bfc_ref,
                    pred_ref):
    """Fused input-projection + fully-unrolled LSTM recurrence + last-step FC.

    x_ref:    (T*B_pad, INPUT_DIM)  time-major flattened inputs (row t*Bp+b)
    wih_ref:  (INPUT_DIM, 4*HIDDEN) W_ih^T, gate columns ordered (i, f, o, g)
    bias_ref: (1, 4*HIDDEN)         b_ih + b_hh, same gate-column order
    whh_ref:  (HIDDEN, 4*HIDDEN)    W_hh^T, same gate-column order
    wfc_ref:  (HIDDEN, OUT_PAD)     W_fc^T zero-padded to 128 lanes
    bfc_ref:  (1, OUT_PAD)
    pred_ref: (B_pad, OUT_PAD)      raw fc output ("predictions", padded)
    """
    TB = x_ref.shape[0]
    Hd = whh_ref.shape[0]
    Bp = pred_ref.shape[0]
    T = TB // Bp

    # Input projection for ALL timesteps in one matmul, hoisted off the serial
    # recurrence critical path.
    gx = (jnp.dot(x_ref[...], wih_ref[...], preferred_element_type=jnp.float32)
          + bias_ref[...])                                      # (T*Bp, 4H)

    h = jnp.zeros((Bp, Hd), jnp.float32)
    c = jnp.zeros((Bp, Hd), jnp.float32)

    # T is small and static: full unroll keeps h/c in vregs and lets the
    # scheduler overlap the step-(t+1) MXU push with step-t EUP/VPU work.
    for t in range(T):
        gates = gx[t * Bp:(t + 1) * Bp, :] + jnp.dot(
            h, whh_ref[...], preferred_element_type=jnp.float32)
        # Gate order (i, f, o, g): one sigmoid over the first 3H columns,
        # one tanh over the last H columns.
        sig = jax.nn.sigmoid(gates[:, 0:3 * Hd])
        i_g = sig[:, 0:Hd]
        f_g = sig[:, Hd:2 * Hd]
        o_g = sig[:, 2 * Hd:3 * Hd]
        g_g = jnp.tanh(gates[:, 3 * Hd:4 * Hd])
        c = f_g * c + i_g * g_g
        h = o_g * jnp.tanh(c)

    # predictions = fc(lstm_out[:, -1, :])
    pred_ref[...] = (jnp.dot(h, wfc_ref[...], preferred_element_type=jnp.float32)
                     + bfc_ref[...])


# ------------------------------- wrapper ----------------------------------- #

def init_params(key, prediction_horizon):
    """Deterministic LSTM / Linear parameters (PyTorch-style uniform init)."""
    ks = jax.random.split(key, 6)
    bound = 1.0 / float(jnp.sqrt(HIDDEN))
    u = lambda k, shape: jax.random.uniform(k, shape, jnp.float32, -bound, bound)
    out = OUTPUT_DIM * prediction_horizon
    return {
        "w_ih": u(ks[0], (4 * HIDDEN, INPUT_DIM)),   # PyTorch gate rows (i,f,g,o)
        "w_hh": u(ks[1], (4 * HIDDEN, HIDDEN)),
        "b_ih": u(ks[2], (4 * HIDDEN,)),
        "b_hh": u(ks[3], (4 * HIDDEN,)),
        "w_fc": u(ks[4], (out, HIDDEN)),
        "b_fc": u(ks[5], (out,)),
    }


def controller_forward(params, inputs, initial_state, prediction_horizon,
                       scaler_min, scaler_max):
    """JAX/Pallas equivalent of Controller.forward.

    inputs:        (B, T, INPUT_DIM) float32 (batch_first, like PyTorch)
    initial_state: (B, 1) float32
    Returns (predictions, (Ps_in, Ps_out, Pl, Pr, eps, s), Pg_hat).
    """
    B, T, _ = inputs.shape
    out_dim = OUTPUT_DIM * prediction_horizon
    b_pad = ((B + 7) // 8) * 8                                   # f32 sublane tile

    # Time-major, batch-padded, flattened to (T*B_pad, INPUT_DIM).
    x_tm = jnp.transpose(inputs.astype(jnp.float32), (1, 0, 2))  # (T, B, 2)
    if b_pad != B:
        x_tm = jnp.pad(x_tm, ((0, 0), (0, b_pad - B), (0, 0)))   # (T, B_pad, 2)
    x_flat = x_tm.reshape(T * b_pad, INPUT_DIM)

    # Gate-column permutation: PyTorch order (i, f, g, o) -> kernel (i, f, o, g).
    perm = jnp.concatenate([
        jnp.arange(0, HIDDEN), jnp.arange(HIDDEN, 2 * HIDDEN),
        jnp.arange(3 * HIDDEN, 4 * HIDDEN), jnp.arange(2 * HIDDEN, 3 * HIDDEN)])
    wih_t = params["w_ih"].T[:, perm]                            # (2, 4H)
    whh_t = params["w_hh"].T[:, perm]                            # (H, 4H)
    bias = (params["b_ih"] + params["b_hh"])[perm].reshape(1, -1)  # (1, 4H)

    # FC weights, zero-padded to a lane-dense 128-wide output.
    wfc_t = jnp.zeros((HIDDEN, OUT_PAD), jnp.float32).at[:, :out_dim].set(
        params["w_fc"].T)
    bfc = jnp.zeros((1, OUT_PAD), jnp.float32).at[:, :out_dim].set(params["b_fc"])

    vmem = pl.BlockSpec(memory_space=pltpu.MemorySpace.VMEM)
    cost = pl.CostEstimate(
        flops=(2 * T * b_pad * INPUT_DIM * 4 * HIDDEN            # input proj
               + 2 * T * b_pad * HIDDEN * 4 * HIDDEN             # recurrence
               + 2 * b_pad * HIDDEN * OUT_PAD),                  # fc
        transcendentals=T * b_pad * 5 * HIDDEN,
        bytes_accessed=4 * (x_flat.size + wih_t.size + bias.size + whh_t.size
                            + wfc_t.size + bfc.size + b_pad * OUT_PAD),
    )

    pred_full = pl.pallas_call(
        _lstm_fc_kernel,
        out_shape=jax.ShapeDtypeStruct((b_pad, OUT_PAD), jnp.float32),
        in_specs=[vmem] * 6,
        out_specs=vmem,
        cost_estimate=cost,
    )(x_flat, wih_t, bias, whh_t, wfc_t, bfc)

    pred_raw = pred_full[:B, :out_dim]                           # (B, out_dim)
    predictions = pred_raw.reshape(B, prediction_horizon, OUTPUT_DIM)

    # MinMaxScaler.inverse_transform: x * (data_max - data_min) + data_min
    rng = (scaler_max - scaler_min).astype(jnp.float32).reshape(1, 1, OUTPUT_DIM)
    minv = scaler_min.astype(jnp.float32).reshape(1, 1, OUTPUT_DIM)
    denorm = predictions * rng + minv
    pv_hat, load_hat = denorm[:, :, 0], denorm[:, :, 1]

    price_tariff = jnp.full_like(pv_hat, 40.0)                   # fixed tariff
    del price_tariff  # consumed only by the (untranslatable) optimization layer

    # TODO(synk): rule-based surrogate for the CVXPY optimization layer.
    surplus = pv_hat - load_hat
    Ps_in = jnp.maximum(surplus, 0.0)     # charge with PV surplus
    Ps_out = jnp.maximum(-surplus, 0.0)   # discharge to cover deficit
    Pl = load_hat
    Pr = pv_hat
    eps = jnp.zeros_like(pv_hat)
    s = initial_state.astype(jnp.float32) + jnp.cumsum(Ps_in - Ps_out, axis=1)

    # compute_Pg: Pg = Pr - Ps_in + Ps_out - Pl (fused elementwise by XLA; a
    # standalone Pallas launch for 8 floats would be pure overhead).
    Pg_hat = Pr - Ps_in + Ps_out - Pl

    return predictions, (Ps_in, Ps_out, Pl, Pr, eps, s), Pg_hat


# --------------------------------- main ------------------------------------ #

if __name__ == "__main__":
    key = jax.random.PRNGKey(0)
    k_param, k_in = jax.random.split(key)

    batch = 2
    lookback_window = 8
    prediction_horizon = 4

    params = init_params(k_param, prediction_horizon)
    inputs = jax.random.normal(k_in, (batch, lookback_window, INPUT_DIM),
                               dtype=jnp.float32)
    initial_state = jnp.full((batch, 1), 0.5, dtype=jnp.float32)

    # MinMaxScaler parameters (deterministic, in-script): data_min / data_max
    scaler_min = jnp.array([0.0, 0.0], dtype=jnp.float32)
    scaler_max = jnp.array([5.0, 10.0], dtype=jnp.float32)

    fwd = jax.jit(controller_forward, static_argnums=(3,))
    out = fwd(params, inputs, initial_state, prediction_horizon,
              scaler_min, scaler_max)
    out = jax.block_until_ready(out)

    predictions, (Ps_in, Ps_out, Pl, Pr, eps, s), Pg_hat = out
    assert predictions.shape == (batch, prediction_horizon, OUTPUT_DIM)
    assert Pg_hat.shape == (batch, prediction_horizon)
    assert s.shape == (batch, prediction_horizon)
    print("KERNEL_OK")
</pallas_src>

<mosaic_0001>
module attributes {stable_mosaic.version = 11 : i64} {
  func.func @_lstm_fc_kernel(%arg0: memref<64x2xf32, #tpu.memory_space<vmem>>, %arg1: memref<2x256xf32, #tpu.memory_space<vmem>>, %arg2: memref<1x256xf32, #tpu.memory_space<vmem>>, %arg3: memref<64x256xf32, #tpu.memory_space<vmem>>, %arg4: memref<64x128xf32, #tpu.memory_space<vmem>>, %arg5: memref<1x128xf32, #tpu.memory_space<vmem>>, %arg6: memref<8x128xf32, #tpu.memory_space<vmem>>) attributes {dimension_semantics = [], scalar_prefetch = 0 : i64, scratch_operands = 0 : i64, tpu.core_type = #tpu.core_type<tc>} {
    %c0 = arith.constant 0 : index
    %c0_0 = arith.constant 0 : index
    %0 = vector.load %arg0[%c0, %c0_0] : memref<64x2xf32, #tpu.memory_space<vmem>>, vector<64x2xf32>
    %c0_1 = arith.constant 0 : index
    %c0_2 = arith.constant 0 : index
    %1 = vector.load %arg1[%c0_1, %c0_2] : memref<2x256xf32, #tpu.memory_space<vmem>>, vector<2x256xf32>
    %cst = arith.constant dense<0.000000e+00> : vector<64x256xf32>
    %2 = tpu.matmul %0, %1, %cst {dimension_numbers = #tpu.dot_dimension_numbers<[1], [0], [0], [1], [0, 0, 1, 1], [], []>} : vector<64x2xf32>, vector<2x256xf32>, vector<64x256xf32> -> vector<64x256xf32>
    %c0_3 = arith.constant 0 : index
    %c0_4 = arith.constant 0 : index
    %3 = vector.load %arg2[%c0_3, %c0_4] : memref<1x256xf32, #tpu.memory_space<vmem>>, vector<1x256xf32>
    %4 = vector.broadcast %3 : vector<1x256xf32> to vector<64x256xf32>
    %5 = arith.addf %2, %4 : vector<64x256xf32>
    %cst_5 = arith.constant 0.000000e+00 : f32
    %6 = vector.broadcast %cst_5 : f32 to vector<8x64xf32>
    %cst_6 = arith.constant 0.000000e+00 : f32
    %7 = vector.broadcast %cst_6 : f32 to vector<8x64xf32>
    %8 = vector.extract_strided_slice %5 {offsets = [0, 0], sizes = [8, 256], strides = [1, 1]} : vector<64x256xf32> to vector<8x256xf32>
    %c0_7 = arith.constant 0 : index
    %c0_8 = arith.constant 0 : index
    %9 = vector.load %arg3[%c0_7, %c0_8] : memref<64x256xf32, #tpu.memory_space<vmem>>, vector<64x256xf32>
    %cst_9 = arith.constant dense<0.000000e+00> : vector<8x256xf32>
    %10 = tpu.matmul %6, %9, %cst_9 {dimension_numbers = #tpu.dot_dimension_numbers<[1], [0], [0], [1], [0, 0, 1, 1], [], []>} : vector<8x64xf32>, vector<64x256xf32>, vector<8x256xf32> -> vector<8x256xf32>
    %11 = arith.addf %8, %10 : vector<8x256xf32>
    %12 = vector.extract_strided_slice %11 {offsets = [0, 0], sizes = [8, 192], strides = [1, 1]} : vector<8x256xf32> to vector<8x192xf32>
    %13 = arith.negf %12 : vector<8x192xf32>
    %14 = math.exp %13 : vector<8x192xf32>
    %cst_10 = arith.constant 1.000000e+00 : f32
    %15 = vector.broadcast %cst_10 : f32 to vector<8x192xf32>
    %16 = arith.addf %15, %14 : vector<8x192xf32>
    %17 = arith.divf %15, %16 : vector<8x192xf32>
    %18 = vector.extract_strided_slice %17 {offsets = [0, 0], sizes = [8, 64], strides = [1, 1]} : vector<8x192xf32> to vector<8x64xf32>
    %19 = vector.extract_strided_slice %17 {offsets = [0, 64], sizes = [8, 64], strides = [1, 1]} : vector<8x192xf32> to vector<8x64xf32>
    %20 = vector.extract_strided_slice %17 {offsets = [0, 128], sizes = [8, 64], strides = [1, 1]} : vector<8x192xf32> to vector<8x64xf32>
    %21 = vector.extract_strided_slice %11 {offsets = [0, 192], sizes = [8, 64], strides = [1, 1]} : vector<8x256xf32> to vector<8x64xf32>
    %22 = math.tanh %21 : vector<8x64xf32>
    %23 = arith.mulf %19, %7 : vector<8x64xf32>
    %24 = arith.mulf %18, %22 : vector<8x64xf32>
    %25 = arith.addf %23, %24 : vector<8x64xf32>
    %26 = math.tanh %25 : vector<8x64xf32>
    %27 = arith.mulf %20, %26 : vector<8x64xf32>
    %28 = vector.extract_strided_slice %5 {offsets = [8, 0], sizes = [8, 256], strides = [1, 1]} : vector<64x256xf32> to vector<8x256xf32>
    %c0_11 = arith.constant 0 : index
    %c0_12 = arith.constant 0 : index
    %29 = vector.load %arg3[%c0_11, %c0_12] : memref<64x256xf32, #tpu.memory_space<vmem>>, vector<64x256xf32>
    %cst_13 = arith.constant dense<0.000000e+00> : vector<8x256xf32>
    %30 = tpu.matmul %27, %29, %cst_13 {dimension_numbers = #tpu.dot_dimension_numbers<[1], [0], [0], [1], [0, 0, 1, 1], [], []>} : vector<8x64xf32>, vector<64x256xf32>, vector<8x256xf32> -> vector<8x256xf32>
    %31 = arith.addf %28, %30 : vector<8x256xf32>
    %32 = vector.extract_strided_slice %31 {offsets = [0, 0], sizes = [8, 192], strides = [1, 1]} : vector<8x256xf32> to vector<8x192xf32>
    %33 = arith.negf %32 : vector<8x192xf32>
    %34 = math.exp %33 : vector<8x192xf32>
    %cst_14 = arith.constant 1.000000e+00 : f32
    %35 = vector.broadcast %cst_14 : f32 to vector<8x192xf32>
    %36 = arith.addf %35, %34 : vector<8x192xf32>
    %37 = arith.divf %35, %36 : vector<8x192xf32>
    %38 = vector.extract_strided_slice %37 {offsets = [0, 0], sizes = [8, 64], strides = [1, 1]} : vector<8x192xf32> to vector<8x64xf32>
    %39 = vector.extract_strided_slice %37 {offsets = [0, 64], sizes = [8, 64], strides = [1, 1]} : vector<8x192xf32> to vector<8x64xf32>
    %40 = vector.extract_strided_slice %37 {offsets = [0, 128], sizes = [8, 64], strides = [1, 1]} : vector<8x192xf32> to vector<8x64xf32>
    %41 = vector.extract_strided_slice %31 {offsets = [0, 192], sizes = [8, 64], strides = [1, 1]} : vector<8x256xf32> to vector<8x64xf32>
    %42 = math.tanh %41 : vector<8x64xf32>
    %43 = arith.mulf %39, %25 : vector<8x64xf32>
    %44 = arith.mulf %38, %42 : vector<8x64xf32>
    %45 = arith.addf %43, %44 : vector<8x64xf32>
    %46 = math.tanh %45 : vector<8x64xf32>
    %47 = arith.mulf %40, %46 : vector<8x64xf32>
    %48 = vector.extract_strided_slice %5 {offsets = [16, 0], sizes = [8, 256], strides = [1, 1]} : vector<64x256xf32> to vector<8x256xf32>
    %c0_15 = arith.constant 0 : index
    %c0_16 = arith.constant 0 : index
    %49 = vector.load %arg3[%c0_15, %c0_16] : memref<64x256xf32, #tpu.memory_space<vmem>>, vector<64x256xf32>
    %cst_17 = arith.constant dense<0.000000e+00> : vector<8x256xf32>
    %50 = tpu.matmul %47, %49, %cst_17 {dimension_numbers = #tpu.dot_dimension_numbers<[1], [0], [0], [1], [0, 0, 1, 1], [], []>} : vector<8x64xf32>, vector<64x256xf32>, vector<8x256xf32> -> vector<8x256xf32>
    %51 = arith.addf %48, %50 : vector<8x256xf32>
    %52 = vector.extract_strided_slice %51 {offsets = [0, 0], sizes = [8, 192], strides = [1, 1]} : vector<8x256xf32> to vector<8x192xf32>
    %53 = arith.negf %52 : vector<8x192xf32>
    %54 = math.exp %53 : vector<8x192xf32>
    %cst_18 = arith.constant 1.000000e+00 : f32
    %55 = vector.broadcast %cst_18 : f32 to vector<8x192xf32>
    %56 = arith.addf %55, %54 : vector<8x192xf32>
    %57 = arith.divf %55, %56 : vector<8x192xf32>
    %58 = vector.extract_strided_slice %57 {offsets = [0, 0], sizes = [8, 64], strides = [1, 1]} : vector<8x192xf32> to vector<8x64xf32>
    %59 = vector.extract_strided_slice %57 {offsets = [0, 64], sizes = [8, 64], strides = [1, 1]} : vector<8x192xf32> to vector<8x64xf32>
    %60 = vector.extract_strided_slice %57 {offsets = [0, 128], sizes = [8, 64], strides = [1, 1]} : vector<8x192xf32> to vector<8x64xf32>
    %61 = vector.extract_strided_slice %51 {offsets = [0, 192], sizes = [8, 64], strides = [1, 1]} : vector<8x256xf32> to vector<8x64xf32>
    %62 = math.tanh %61 : vector<8x64xf32>
    %63 = arith.mulf %59, %45 : vector<8x64xf32>
    %64 = arith.mulf %58, %62 : vector<8x64xf32>
    %65 = arith.addf %63, %64 : vector<8x64xf32>
    %66 = math.tanh %65 : vector<8x64xf32>
    %67 = arith.mulf %60, %66 : vector<8x64xf32>
    %68 = vector.extract_strided_slice %5 {offsets = [24, 0], sizes = [8, 256], strides = [1, 1]} : vector<64x256xf32> to vector<8x256xf32>
    %c0_19 = arith.constant 0 : index
    %c0_20 = arith.constant 0 : index
    %69 = vector.load %arg3[%c0_19, %c0_20] : memref<64x256xf32, #tpu.memory_space<vmem>>, vector<64x256xf32>
    %cst_21 = arith.constant dense<0.000000e+00> : vector<8x256xf32>
    %70 = tpu.matmul %67, %69, %cst_21 {dimension_numbers = #tpu.dot_dimension_numbers<[1], [0], [0], [1], [0, 0, 1, 1], [], []>} : vector<8x64xf32>, vector<64x256xf32>, vector<8x256xf32> -> vector<8x256xf32>
    %71 = arith.addf %68, %70 : vector<8x256xf32>
    %72 = vector.extract_strided_slice %71 {offsets = [0, 0], sizes = [8, 192], strides = [1, 1]} : vector<8x256xf32> to vector<8x192xf32>
    %73 = arith.negf %72 : vector<8x192xf32>
    %74 = math.exp %73 : vector<8x192xf32>
    %cst_22 = arith.constant 1.000000e+00 : f32
    %75 = vector.broadcast %cst_22 : f32 to vector<8x192xf32>
    %76 = arith.addf %75, %74 : vector<8x192xf32>
    %77 = arith.divf %75, %76 : vector<8x192xf32>
    %78 = vector.extract_strided_slice %77 {offsets = [0, 0], sizes = [8, 64], strides = [1, 1]} : vector<8x192xf32> to vector<8x64xf32>
    %79 = vector.extract_strided_slice %77 {offsets = [0, 64], sizes = [8, 64], strides = [1, 1]} : vector<8x192xf32> to vector<8x64xf32>
    %80 = vector.extract_strided_slice %77 {offsets = [0, 128], sizes = [8, 64], strides = [1, 1]} : vector<8x192xf32> to vector<8x64xf32>
    %81 = vector.extract_strided_slice %71 {offsets = [0, 192], sizes = [8, 64], strides = [1, 1]} : vector<8x256xf32> to vector<8x64xf32>
    %82 = math.tanh %81 : vector<8x64xf32>
    %83 = arith.mulf %79, %65 : vector<8x64xf32>
    %84 = arith.mulf %78, %82 : vector<8x64xf32>
    %85 = arith.addf %83, %84 : vector<8x64xf32>
    %86 = math.tanh %85 : vector<8x64xf32>
    %87 = arith.mulf %80, %86 : vector<8x64xf32>
    %88 = vector.extract_strided_slice %5 {offsets = [32, 0], sizes = [8, 256], strides = [1, 1]} : vector<64x256xf32> to vector<8x256xf32>
    %c0_23 = arith.constant 0 : index
    %c0_24 = arith.constant 0 : index
    %89 = vector.load %arg3[%c0_23, %c0_24] : memref<64x256xf32, #tpu.memory_space<vmem>>, vector<64x256xf32>
    %cst_25 = arith.constant dense<0.000000e+00> : vector<8x256xf32>
    %90 = tpu.matmul %87, %89, %cst_25 {dimension_numbers = #tpu.dot_dimension_numbers<[1], [0], [0], [1], [0, 0, 1, 1], [], []>} : vector<8x64xf32>, vector<64x256xf32>, vector<8x256xf32> -> vector<8x256xf32>
    %91 = arith.addf %88, %90 : vector<8x256xf32>
    %92 = vector.extract_strided_slice %91 {offsets = [0, 0], sizes = [8, 192], strides = [1, 1]} : vector<8x256xf32> to vector<8x192xf32>
    %93 = arith.negf %92 : vector<8x192xf32>
    %94 = math.exp %93 : vector<8x192xf32>
    %cst_26 = arith.constant 1.000000e+00 : f32
    %95 = vector.broadcast %cst_26 : f32 to vector<8x192xf32>
    %96 = arith.addf %95, %94 : vector<8x192xf32>
    %97 = arith.divf %95, %96 : vector<8x192xf32>
    %98 = vector.extract_strided_slice %97 {offsets = [0, 0], sizes = [8, 64], strides = [1, 1]} : vector<8x192xf32> to vector<8x64xf32>
    %99 = vector.extract_strided_slice %97 {offsets = [0, 64], sizes = [8, 64], strides = [1, 1]} : vector<8x192xf32> to vector<8x64xf32>
    %100 = vector.extract_strided_slice %97 {offsets = [0, 128], sizes = [8, 64], strides = [1, 1]} : vector<8x192xf32> to vector<8x64xf32>
    %101 = vector.extract_strided_slice %91 {offsets = [0, 192], sizes = [8, 64], strides = [1, 1]} : vector<8x256xf32> to vector<8x64xf32>
    %102 = math.tanh %101 : vector<8x64xf32>
    %103 = arith.mulf %99, %85 : vector<8x64xf32>
    %104 = arith.mulf %98, %102 : vector<8x64xf32>
    %105 = arith.addf %103, %104 : vector<8x64xf32>
    %106 = math.tanh %105 : vector<8x64xf32>
    %107 = arith.mulf %100, %106 : vector<8x64xf32>
    %108 = vector.extract_strided_slice %5 {offsets = [40, 0], sizes = [8, 256], strides = [1, 1]} : vector<64x256xf32> to vector<8x256xf32>
    %c0_27 = arith.constant 0 : index
    %c0_28 = arith.constant 0 : index
    %109 = vector.load %arg3[%c0_27, %c0_28] : memref<64x256xf32, #tpu.memory_space<vmem>>, vector<64x256xf32>
    %cst_29 = arith.constant dense<0.000000e+00> : vector<8x256xf32>
    %110 = tpu.matmul %107, %109, %cst_29 {dimension_numbers = #tpu.dot_dimension_numbers<[1], [0], [0], [1], [0, 0, 1, 1], [], []>} : vector<8x64xf32>, vector<64x256xf32>, vector<8x256xf32> -> vector<8x256xf32>
    %111 = arith.addf %108, %110 : vector<8x256xf32>
    %112 = vector.extract_strided_slice %111 {offsets = [0, 0], sizes = [8, 192], strides = [1, 1]} : vector<8x256xf32> to vector<8x192xf32>
    %113 = arith.negf %112 : vector<8x192xf32>
    %114 = math.exp %113 : vector<8x192xf32>
    %cst_30 = arith.constant 1.000000e+00 : f32
    %115 = vector.broadcast %cst_30 : f32 to vector<8x192xf32>
    %116 = arith.addf %115, %114 : vector<8x192xf32>
    %117 = arith.divf %115, %116 : vector<8x192xf32>
    %118 = vector.extract_strided_slice %117 {offsets = [0, 0], sizes = [8, 64], strides = [1, 1]} : vector<8x192xf32> to vector<8x64xf32>
    %119 = vector.extract_strided_slice %117 {offsets = [0, 64], sizes = [8, 64], strides = [1, 1]} : vector<8x192xf32> to vector<8x64xf32>
    %120 = vector.extract_strided_slice %117 {offsets = [0, 128], sizes = [8, 64], strides = [1, 1]} : vector<8x192xf32> to vector<8x64xf32>
    %121 = vector.extract_strided_slice %111 {offsets = [0, 192], sizes = [8, 64], strides = [1, 1]} : vector<8x256xf32> to vector<8x64xf32>
    %122 = math.tanh %121 : vector<8x64xf32>
    %123 = arith.mulf %119, %105 : vector<8x64xf32>
    %124 = arith.mulf %118, %122 : vector<8x64xf32>
    %125 = arith.addf %123, %124 : vector<8x64xf32>
    %126 = math.tanh %125 : vector<8x64xf32>
    %127 = arith.mulf %120, %126 : vector<8x64xf32>
    %128 = vector.extract_strided_slice %5 {offsets = [48, 0], sizes = [8, 256], strides = [1, 1]} : vector<64x256xf32> to vector<8x256xf32>
    %c0_31 = arith.constant 0 : index
    %c0_32 = arith.constant 0 : index
    %129 = vector.load %arg3[%c0_31, %c0_32] : memref<64x256xf32, #tpu.memory_space<vmem>>, vector<64x256xf32>
    %cst_33 = arith.constant dense<0.000000e+00> : vector<8x256xf32>
    %130 = tpu.matmul %127, %129, %cst_33 {dimension_numbers = #tpu.dot_dimension_numbers<[1], [0], [0], [1], [0, 0, 1, 1], [], []>} : vector<8x64xf32>, vector<64x256xf32>, vector<8x256xf32> -> vector<8x256xf32>
    %131 = arith.addf %128, %130 : vector<8x256xf32>
    %132 = vector.extract_strided_slice %131 {offsets = [0, 0], sizes = [8, 192], strides = [1, 1]} : vector<8x256xf32> to vector<8x192xf32>
    %133 = arith.negf %132 : vector<8x192xf32>
    %134 = math.exp %133 : vector<8x192xf32>
    %cst_34 = arith.constant 1.000000e+00 : f32
    %135 = vector.broadcast %cst_34 : f32 to vector<8x192xf32>
    %136 = arith.addf %135, %134 : vector<8x192xf32>
    %137 = arith.divf %135, %136 : vector<8x192xf32>
    %138 = vector.extract_strided_slice %137 {offsets = [0, 0], sizes = [8, 64], strides = [1, 1]} : vector<8x192xf32> to vector<8x64xf32>
    %139 = vector.extract_strided_slice %137 {offsets = [0, 64], sizes = [8, 64], strides = [1, 1]} : vector<8x192xf32> to vector<8x64xf32>
    %140 = vector.extract_strided_slice %137 {offsets = [0, 128], sizes = [8, 64], strides = [1, 1]} : vector<8x192xf32> to vector<8x64xf32>
    %141 = vector.extract_strided_slice %131 {offsets = [0, 192], sizes = [8, 64], strides = [1, 1]} : vector<8x256xf32> to vector<8x64xf32>
    %142 = math.tanh %141 : vector<8x64xf32>
    %143 = arith.mulf %139, %125 : vector<8x64xf32>
    %144 = arith.mulf %138, %142 : vector<8x64xf32>
    %145 = arith.addf %143, %144 : vector<8x64xf32>
    %146 = math.tanh %145 : vector<8x64xf32>
    %147 = arith.mulf %140, %146 : vector<8x64xf32>
    %148 = vector.extract_strided_slice %5 {offsets = [56, 0], sizes = [8, 256], strides = [1, 1]} : vector<64x256xf32> to vector<8x256xf32>
    %c0_35 = arith.constant 0 : index
    %c0_36 = arith.constant 0 : index
    %149 = vector.load %arg3[%c0_35, %c0_36] : memref<64x256xf32, #tpu.memory_space<vmem>>, vector<64x256xf32>
    %cst_37 = arith.constant dense<0.000000e+00> : vector<8x256xf32>
    %150 = tpu.matmul %147, %149, %cst_37 {dimension_numbers = #tpu.dot_dimension_numbers<[1], [0], [0], [1], [0, 0, 1, 1], [], []>} : vector<8x64xf32>, vector<64x256xf32>, vector<8x256xf32> -> vector<8x256xf32>
    %151 = arith.addf %148, %150 : vector<8x256xf32>
    %152 = vector.extract_strided_slice %151 {offsets = [0, 0], sizes = [8, 192], strides = [1, 1]} : vector<8x256xf32> to vector<8x192xf32>
    %153 = arith.negf %152 : vector<8x192xf32>
    %154 = math.exp %153 : vector<8x192xf32>
    %cst_38 = arith.constant 1.000000e+00 : f32
    %155 = vector.broadcast %cst_38 : f32 to vector<8x192xf32>
    %156 = arith.addf %155, %154 : vector<8x192xf32>
    %157 = arith.divf %155, %156 : vector<8x192xf32>
    %158 = vector.extract_strided_slice %157 {offsets = [0, 0], sizes = [8, 64], strides = [1, 1]} : vector<8x192xf32> to vector<8x64xf32>
    %159 = vector.extract_strided_slice %157 {offsets = [0, 64], sizes = [8, 64], strides = [1, 1]} : vector<8x192xf32> to vector<8x64xf32>
    %160 = vector.extract_strided_slice %157 {offsets = [0, 128], sizes = [8, 64], strides = [1, 1]} : vector<8x192xf32> to vector<8x64xf32>
    %161 = vector.extract_strided_slice %151 {offsets = [0, 192], sizes = [8, 64], strides = [1, 1]} : vector<8x256xf32> to vector<8x64xf32>
    %162 = math.tanh %161 : vector<8x64xf32>
    %163 = arith.mulf %159, %145 : vector<8x64xf32>
    %164 = arith.mulf %158, %162 : vector<8x64xf32>
    %165 = arith.addf %163, %164 : vector<8x64xf32>
    %166 = math.tanh %165 : vector<8x64xf32>
    %167 = arith.mulf %160, %166 : vector<8x64xf32>
    %c0_39 = arith.constant 0 : index
    %c0_40 = arith.constant 0 : index
    %168 = vector.load %arg4[%c0_39, %c0_40] : memref<64x128xf32, #tpu.memory_space<vmem>>, vector<64x128xf32>
    %cst_41 = arith.constant dense<0.000000e+00> : vector<8x128xf32>
    %169 = tpu.matmul %167, %168, %cst_41 {dimension_numbers = #tpu.dot_dimension_numbers<[1], [0], [0], [1], [0, 0, 1, 1], [], []>} : vector<8x64xf32>, vector<64x128xf32>, vector<8x128xf32> -> vector<8x128xf32>
    %c0_42 = arith.constant 0 : index
    %c0_43 = arith.constant 0 : index
    %170 = vector.load %arg5[%c0_42, %c0_43] : memref<1x128xf32, #tpu.memory_space<vmem>>, vector<1x128xf32>
    %171 = vector.broadcast %170 : vector<1x128xf32> to vector<8x128xf32>
    %172 = arith.addf %169, %171 : vector<8x128xf32>
    %c0_44 = arith.constant 0 : index
    %c0_45 = arith.constant 0 : index
    %173 = vector.load %arg6[%c0_44, %c0_45] : memref<8x128xf32, #tpu.memory_space<vmem>>, vector<8x128xf32>
    tpu.vector_store %arg6[%c0_44, %c0_45], %172 {strides = array<i32>} : memref<8x128xf32, #tpu.memory_space<vmem>>, vector<8x128xf32>,
    return
  }
}

</mosaic_0001>

<llo_original>
// kernel: sub.5
$region0: #{sub.5}
  #allocation0 [shape = 's32[1]{0}', space=sflag, size = 0x4, scoped, tag = 'scoped memory for sub.5']
  %s0 = inlined_call_operand.vmem [shape: f32[2], index: 0, kind: input, shape index: {}]
  %s1 = inlined_call_operand.vmem [shape: f32[2], index: 1, kind: input, shape index: {}]
  %s2 = inlined_call_operand.vmem [shape: f32[2], index: 2, kind: output, shape index: {}]
  %v3 = vld [vmem:[%s0] sm:$0x1]
  %v4 = vld [vmem:[%s1] sm:$0x1]
  %5 = xla_tuple %v3, %v4
  %6 = xla_tuple %5
  %v7 = vsub.f32 %v3, %v4
  %8 = xla_tuple %v7
  %9 = vst [vmem:[%s2] sm:$0x1] %v7

// kernel: sub.7
$region0: #{sub.7}
  #allocation0 [shape = 's32[1]{0}', space=sflag, size = 0x4, scoped, tag = 'scoped memory for sub.7']
  %s0 = inlined_call_operand.vmem [shape: f32[2,4], index: 0, kind: input, shape index: {}]
  %s1 = inlined_call_operand.vmem [shape: f32[2,4], index: 1, kind: input, shape index: {}]
  %s2 = inlined_call_operand.vmem [shape: f32[2,4], index: 2, kind: output, shape index: {}]
  %v3 = vld [vmem:[%s0] sm:$0x3]
  %v4 = vld [vmem:[%s1] sm:$0x3]
  %5 = xla_tuple %v3, %v4
  %6 = xla_tuple %5
  %v7 = vsub.f32 %v3, %v4
  %8 = xla_tuple %v7
  %9 = vst [vmem:[%s2] sm:$0x3] %v7

// kernel: controller_forward.1
$region0: #{controller_forward.1}
  #allocation0 [shape = 'u32[]', space=smem, size = 0x4, offset = 0x4, fixed_abs, tag = 'smem constant byte address 0x4 - core index']
  #allocation1 [shape = 'u32[72,128]{1,0:T(1,128)}', space=vmem, size = 0x9000, scoped, tag = 'internal scratch']
  %s0 = inlined_call_operand.vmem [shape: f32[64,2], index: 0, kind: input, shape index: {}]
  %s1 = inlined_call_operand.vmem [shape: f32[2,256], index: 1, kind: input, shape index: {}]
  %s2 = inlined_call_operand.vmem [shape: f32[1,256], index: 2, kind: input, shape index: {}]
  %s3 = inlined_call_operand.vmem [shape: f32[64,256], index: 3, kind: input, shape index: {}]
  %s4 = inlined_call_operand.vmem [shape: f32[64,128], index: 4, kind: input, shape index: {}]
  %s5 = inlined_call_operand.vmem [shape: f32[1,128], index: 5, kind: input, shape index: {}]
  %s6 = inlined_call_operand.vmem [shape: f32[8,128], index: 6, kind: output, shape index: {}]
  %s7 = sld [smem:[#allocation0]]
  $region34: #{controller_forward.1} parent=0
    _
  %s9 = ssub.s32 1, %s7
  %s10 = scalar_select 0, %s9, %s7
  // Predicated region
  $region2: #{controller_forward.1} parent=0 // pred_check
    _
  $region3: #{controller_forward.1} parent=0 // pred_check_branch
    %12 = sbr.rel (0) target = $region5
  $region4: #{controller_forward.1} parent=0 // pred_region
    _
  $region5: #{controller_forward.1} parent=0 // pred_fallthru
    _
  // Predicated region
  $region6: #{controller_forward.1} parent=0 // pred_check
    _
  $region7: #{controller_forward.1} parent=0 // pred_check_branch
    %14 = sbr.rel (0) target = $region9
  $region8: #{controller_forward.1} parent=0 // pred_region
    _
  $region9: #{controller_forward.1} parent=0 // pred_fallthru
    _
  // Predicated region
  $region10: #{controller_forward.1} parent=0 // pred_check
    _
  $region11: #{controller_forward.1} parent=0 // pred_check_branch
    %16 = sbr.rel (0) target = $region13
  $region12: #{controller_forward.1} parent=0 // pred_region
    _
  $region13: #{controller_forward.1} parent=0 // pred_fallthru
    _
  // Predicated region
  $region14: #{controller_forward.1} parent=0 // pred_check
    _
  $region15: #{controller_forward.1} parent=0 // pred_check_branch
    %18 = sbr.rel (0) target = $region17
  $region16: #{controller_forward.1} parent=0 // pred_region
    _
  $region17: #{controller_forward.1} parent=0 // pred_fallthru
    _
  // Predicated region
  $region18: #{controller_forward.1} parent=0 // pred_check
    _
  $region19: #{controller_forward.1} parent=0 // pred_check_branch
    %20 = sbr.rel (0) target = $region21
  $region20: #{controller_forward.1} parent=0 // pred_region
    _
  $region21: #{controller_forward.1} parent=0 // pred_fallthru
    _
  // Predicated region
  $region22: #{controller_forward.1} parent=0 // pred_check
    _
  $region23: #{controller_forward.1} parent=0 // pred_check_branch
    %22 = sbr.rel (0) target = $region25
  $region24: #{controller_forward.1} parent=0 // pred_region
    _
  $region25: #{controller_forward.1} parent=0 // pred_fallthru
    _
  %v23 = vld [vmem:[%s0] sm:$0xff]
  %v24 = vld [vmem:[%s0 + $0x8] sm:$0xff]
  %v25 = vld [vmem:[%s0 + $0x10] sm:$0xff]
  %v26 = vld [vmem:[%s0 + $0x18] sm:$0xff]
  %v27 = vld [vmem:[%s0 + $0x20] sm:$0xff]
  %v28 = vld [vmem:[%s0 + $0x28] sm:$0xff]
  %v29 = vld [vmem:[%s0 + $0x30] sm:$0xff]
  %v30 = vld [vmem:[%s0 + $0x38] sm:$0xff]
  %v31 = vld [vmem:[%s1] sm:$0xf]
  %v32 = vld [vmem:[%s2] sm:$0x3]
  %v34 = vperm.slane %v32, 0
  %v35 = vperm.slane %v32, 1
  %39 = vst [vmem:[#allocation1] ss:$4 sm:$0xff] %v31
  %v40 = vld.sshfl [vmem:[#allocation1] sm:$0xff pattern:$0x73625140]
  %v41 = vld.sshfl [vmem:[#allocation1 + $0x8] sm:$0xff pattern:$0x73625140]
  %vm42 = vcmask 15360
  %v44 = vsel %vm42, %v23, 0
  %v47 = vsel %vm42, %v24, 0
  %v50 = vsel %vm42, %v25, 0
  %v53 = vsel %vm42, %v26, 0
  %v56 = vsel %vm42, %v27, 0
  %v59 = vsel %vm42, %v28, 0
  %v62 = vsel %vm42, %v29, 0
  %v65 = vsel %vm42, %v30, 0
  %vm67 = vcmask 1041408
  %v68 = vsel %vm67, %v40, 0
  %v70 = vsel %vm67, %v41, 0
  %72 = vmatpush.msra.mxu0 0.0
  %73 = vmatpush.msra.mxu0 0.0
  %74 = vmatpush.msra.mxu0 0.0
  %75 = vmatpush.msra.mxu0 0.0
  %76 = vmatpush.msra.mxu0 0.0
  %77 = vmatpush.msra.mxu0 0.0
  %78 = vmatpush.msra.mxu0 0.0
  %79 = vmatpush.msra.mxu0 0.0
  %80 = vmatpush.msra.mxu0 0.0
  %81 = vmatpush.msra.mxu0 0.0
  %82 = vmatpush.msra.mxu0 0.0
  %83 = vmatpush.msra.mxu0 0.0
  %84 = vmatpush.msra.mxu0 0.0
  %85 = vmatpush.msra.mxu0 0.0
  %86 = vmatpush.msra.mxu0 0.0
  %87 = vmatpush.msra.mxu0 %v68
  %88 = vmatmul.f32.gmra.mxu0 %v44
  %v89 = vpop.f32.mrf.mxu0
  %v90 = vadd.f32 %v34, %v89
  %91 = vmatmul.f32.gmra.mxu0 %v47
  %v92 = vpop.f32.mrf.mxu0
  %v93 = vadd.f32 %v34, %v92
  %94 = vmatmul.f32.gmra.mxu0 %v50
  %v95 = vpop.f32.mrf.mxu0
  %v96 = vadd.f32 %v34, %v95
  %97 = vmatmul.f32.gmra.mxu0 %v53
  %v98 = vpop.f32.mrf.mxu0
  %v99 = vadd.f32 %v34, %v98
  %100 = vmatmul.f32.gmra.mxu0 %v56
  %v101 = vpop.f32.mrf.mxu0
  %v102 = vadd.f32 %v34, %v101
  %103 = vmatmul.f32.gmra.mxu0 %v59
  %v104 = vpop.f32.mrf.mxu0
  %v105 = vadd.f32 %v34, %v104
  %106 = vmatmul.f32.gmra.mxu0 %v62
  %v107 = vpop.f32.mrf.mxu0
  %v108 = vadd.f32 %v34, %v107
  %109 = vmatmul.f32.gmra.mxu0 %v65
  %v110 = vpop.f32.mrf.mxu0
  %v111 = vadd.f32 %v34, %v110
  %112 = vdwg.mxu0
  %113 = vmatpush.msra.mxu0 0.0
  %114 = vmatpush.msra.mxu0 0.0
  %115 = vmatpush.msra.mxu0 0.0
  %116 = vmatpush.msra.mxu0 0.0
  %117 = vmatpush.msra.mxu0 0.0
  %118 = vmatpush.msra.mxu0 0.0
  %119 = vmatpush.msra.mxu0 0.0
  %120 = vmatpush.msra.mxu0 0.0
  %121 = vmatpush.msra.mxu0 0.0
  %122 = vmatpush.msra.mxu0 0.0
  %123 = vmatpush.msra.mxu0 0.0
  %124 = vmatpush.msra.mxu0 0.0
  %125 = vmatpush.msra.mxu0 0.0
  %126 = vmatpush.msra.mxu0 0.0
  %127 = vmatpush.msra.mxu0 0.0
  %128 = vmatpush.msra.mxu0 %v70
  %129 = vmatmul.f32.gmra.mxu0 %v44
  %v130 = vpop.f32.mrf.mxu0
  %v131 = vadd.f32 %v35, %v130
  %132 = vmatmul.f32.gmra.mxu0 %v47
  %v133 = vpop.f32.mrf.mxu0
  %v134 = vadd.f32 %v35, %v133
  %135 = vmatmul.f32.gmra.mxu0 %v50
  %v136 = vpop.f32.mrf.mxu0
  %v137 = vadd.f32 %v35, %v136
  %138 = vmatmul.f32.gmra.mxu0 %v53
  %v139 = vpop.f32.mrf.mxu0
  %v140 = vadd.f32 %v35, %v139
  %141 = vmatmul.f32.gmra.mxu0 %v56
  %v142 = vpop.f32.mrf.mxu0
  %v143 = vadd.f32 %v35, %v142
  %144 = vmatmul.f32.gmra.mxu0 %v59
  %v145 = vpop.f32.mrf.mxu0
  %v146 = vadd.f32 %v35, %v145
  %147 = vmatmul.f32.gmra.mxu0 %v62
  %v148 = vpop.f32.mrf.mxu0
  %v149 = vadd.f32 %v35, %v148
  %150 = vmatmul.f32.gmra.mxu0 %v65
  %v151 = vpop.f32.mrf.mxu0
  %v152 = vadd.f32 %v35, %v151
  %153 = vdwg.mxu0
  %v154 = vld [vmem:[%s3] sm:$0xff]
  %v155 = vld [vmem:[%s3 + $0x8] sm:$0xff]
  %v156 = vld [vmem:[%s3 + $0x10] sm:$0xff]
  %v157 = vld [vmem:[%s3 + $0x18] sm:$0xff]
  %v158 = vld [vmem:[%s3 + $0x20] sm:$0xff]
  %v159 = vld [vmem:[%s3 + $0x28] sm:$0xff]
  %v160 = vld [vmem:[%s3 + $0x30] sm:$0xff]
  %v161 = vld [vmem:[%s3 + $0x38] sm:$0xff]
  %v162 = vld [vmem:[%s3 + $0x40] sm:$0xff]
  %v163 = vld [vmem:[%s3 + $0x48] sm:$0xff]
  %v164 = vld [vmem:[%s3 + $0x50] sm:$0xff]
  %v165 = vld [vmem:[%s3 + $0x58] sm:$0xff]
  %v166 = vld [vmem:[%s3 + $0x60] sm:$0xff]
  %v167 = vld [vmem:[%s3 + $0x68] sm:$0xff]
  %v168 = vld [vmem:[%s3 + $0x70] sm:$0xff]
  %v169 = vld [vmem:[%s3 + $0x78] sm:$0xff]
  %vm170 = vcmask 523264
  %v172 = vsel %vm170, 0.0, 0
  %174 = vmatpush.msra.mxu0 0.0
  %175 = vmatpush.msra.mxu0 0.0
  %176 = vmatpush.msra.mxu0 0.0
  %177 = vmatpush.msra.mxu0 0.0
  %178 = vmatpush.msra.mxu0 0.0
  %179 = vmatpush.msra.mxu0 0.0
  %180 = vmatpush.msra.mxu0 0.0
  %181 = vmatpush.msra.mxu0 0.0
  %182 = vmatpush.msra.mxu0 %v168
  %183 = vmatpush.msra.mxu0 %v166
  %184 = vmatpush.msra.mxu0 %v164
  %185 = vmatpush.msra.mxu0 %v162
  %186 = vmatpush.msra.mxu0 %v160
  %187 = vmatpush.msra.mxu0 %v158
  %188 = vmatpush.msra.mxu0 %v156
  %189 = vmatpush.msra.mxu0 %v154
  %190 = vmatmul.f32.gmra.mxu0 %v172
  %v191 = vpop.f32.mrf.mxu0
  %v192 = vadd.f32 0.0, %v191
  %193 = vdwg.mxu0
  %194 = vmatpush.msra.mxu0 0.0
  %195 = vmatpush.msra.mxu0 0.0
  %196 = vmatpush.msra.mxu0 0.0
  %197 = vmatpush.msra.mxu0 0.0
  %198 = vmatpush.msra.mxu0 0.0
  %199 = vmatpush.msra.mxu0 0.0
  %200 = vmatpush.msra.mxu0 0.0
  %201 = vmatpush.msra.mxu0 0.0
  %202 = vmatpush.msra.mxu0 %v169
  %203 = vmatpush.msra.mxu0 %v167
  %204 = vmatpush.msra.mxu0 %v165
  %205 = vmatpush.msra.mxu0 %v163
  %206 = vmatpush.msra.mxu0 %v161
  %207 = vmatpush.msra.mxu0 %v159
  %208 = vmatpush.msra.mxu0 %v157
  %209 = vmatpush.msra.mxu0 %v155
  %210 = vmatmul.f32.gmra.mxu0 %v172
  %v211 = vpop.f32.mrf.mxu0
  %v212 = vadd.f32 0.0, %v211
  %213 = vdwg.mxu0
  %v214 = vadd.f32 %v90, %v192
  %v215 = vadd.f32 %v131, %v212
  %v216 = vxor.u32 %v214, 2147483648
  %v217 = vxor.u32 %v215, 2147483648
  %v218 = vmul.f32 %v216, 1.442695
  %v219 = vpow.pop %v218
  %v220 = vmul.f32 %v217, 1.442695
  %v221 = vpow.pop %v220
  %v222 = vadd.f32 %v219, 1.0
  %v223 = vadd.f32 %v221, 1.0
  %v224 = vrcp.pop %v222
  %v225 = vmul.f32 %v222, %v224
  %v226 = vsub.f32 1.0, %v225
  %v227 = vmul.f32 %v224, %v226
  %v228 = vadd.f32 %v224, %v227
  %vm229 = vweird.f32 %v222
  %vm230 = vweird.f32 %v224
  %vm231 = vmor %vm229, %vm230
  %v232 = vsel %vm231, %v224, %v228
  %v233 = vand.u32 2147483647, %v222
  %vm234 = vcmp.eq.f32.partialorder %v233, 8.507059e+37
  %v235 = vand.u32 %v222, 2147483648
  %v236 = vor.u32 1.1754944e-38, %v235
  %v237 = vsel %vm234, %v236, %v232
  %v238 = vmul.f32 1.0, %v237
  %v239 = vrcp.pop %v223
  %v240 = vmul.f32 %v223, %v239
  %v241 = vsub.f32 1.0, %v240
  %v242 = vmul.f32 %v239, %v241
  %v243 = vadd.f32 %v239, %v242
  %vm244 = vweird.f32 %v223
  %vm245 = vweird.f32 %v239
  %vm246 = vmor %vm244, %vm245
  %v247 = vsel %vm246, %v239, %v243
  %v248 = vand.u32 2147483647, %v223
  %vm249 = vcmp.eq.f32.partialorder %v248, 8.507059e+37
  %v250 = vand.u32 %v223, 2147483648
  %v251 = vor.u32 1.1754944e-38, %v250
  %v252 = vsel %vm249, %v251, %v247
  %v253 = vmul.f32 1.0, %v252
  %v254 = vtanh.pop %v215
  %v255 = vmul.f32 %v238, 0.0
  %257 = vrot.lane.b32.xlu0 %v254, 64
  %v258 = vpop.permute.xlu0 %257
  %v260 = vmul.f32 %v238, %v258
  %262 = vrot.lane.b32.xlu0 %v260, 64
  %v263 = vpop.permute.xlu0 %262
  %v265 = vadd.f32 %v255, %v263
  %v266 = vtanh.pop %v265
  %268 = vrot.lane.b32.xlu0 %v266, 64
  %v269 = vpop.permute.xlu0 %268
  %v271 = vmul.f32 %v253, %v269
  %v273 = vsel %vm170, %v271, 0
  %275 = vmatpush.msra.mxu0 0.0
  %276 = vmatpush.msra.mxu0 0.0
  %277 = vmatpush.msra.mxu0 0.0
  %278 = vmatpush.msra.mxu0 0.0
  %279 = vmatpush.msra.mxu0 0.0
  %280 = vmatpush.msra.mxu0 0.0
  %281 = vmatpush.msra.mxu0 0.0
  %282 = vmatpush.msra.mxu0 0.0
  %283 = vmatpush.msra.mxu0 %v168
  %284 = vmatpush.msra.mxu0 %v166
  %285 = vmatpush.msra.mxu0 %v164
  %286 = vmatpush.msra.mxu0 %v162
  %287 = vmatpush.msra.mxu0 %v160
  %288 = vmatpush.msra.mxu0 %v158
  %289 = vmatpush.msra.mxu0 %v156
  %290 = vmatpush.msra.mxu0 %v154
  %291 = vmatmul.f32.gmra.mxu0 %v273
  %v292 = vpop.f32.mrf.mxu0
  %v293 = vadd.f32 0.0, %v292
  %294 = vdwg.mxu0
  %295 = vmatpush.msra.mxu0 0.0
  %296 = vmatpush.msra.mxu0 0.0
  %297 = vmatpush.msra.mxu0 0.0
  %298 = vmatpush.msra.mxu0 0.0
  %299 = vmatpush.msra.mxu0 0.0
  %300 = vmatpush.msra.mxu0 0.0
  %301 = vmatpush.msra.mxu0 0.0
  %302 = vmatpush.msra.mxu0 0.0
  %303 = vmatpush.msra.mxu0 %v169
  %304 = vmatpush.msra.mxu0 %v167
  %305 = vmatpush.msra.mxu0 %v165
  %306 = vmatpush.msra.mxu0 %v163
  %307 = vmatpush.msra.mxu0 %v161
  %308 = vmatpush.msra.mxu0 %v159
  %309 = vmatpush.msra.mxu0 %v157
  %310 = vmatpush.msra.mxu0 %v155
  %311 = vmatmul.f32.gmra.mxu0 %v273
  %v312 = vpop.f32.mrf.mxu0
  %v313 = vadd.f32 0.0, %v312
  %314 = vdwg.mxu0
  %v315 = vadd.f32 %v93, %v293
  %v316 = vadd.f32 %v134, %v313
  %v317 = vxor.u32 %v315, 2147483648
  %v318 = vxor.u32 %v316, 2147483648
  %v319 = vmul.f32 %v317, 1.442695
  %v320 = vpow.pop %v319
  %v321 = vmul.f32 %v318, 1.442695
  %v322 = vpow.pop %v321
  %v323 = vadd.f32 %v320, 1.0
  %v324 = vadd.f32 %v322, 1.0
  %v325 = vrcp.pop %v323
  %v326 = vmul.f32 %v323, %v325
  %v327 = vsub.f32 1.0, %v326
  %v328 = vmul.f32 %v325, %v327
  %v329 = vadd.f32 %v325, %v328
  %vm330 = vweird.f32 %v323
  %vm331 = vweird.f32 %v325
  %vm332 = vmor %vm330, %vm331
  %v333 = vsel %vm332, %v325, %v329
  %v334 = vand.u32 2147483647, %v323
  %vm335 = vcmp.eq.f32.partialorder %v334, 8.507059e+37
  %v336 = vand.u32 %v323, 2147483648
  %v337 = vor.u32 1.1754944e-38, %v336
  %v338 = vsel %vm335, %v337, %v333
  %v339 = vmul.f32 1.0, %v338
  %v340 = vrcp.pop %v324
  %v341 = vmul.f32 %v324, %v340
  %v342 = vsub.f32 1.0, %v341
  %v343 = vmul.f32 %v340, %v342
  %v344 = vadd.f32 %v340, %v343
  %vm345 = vweird.f32 %v324
  %vm346 = vweird.f32 %v340
  %vm347 = vmor %vm345, %vm346
  %v348 = vsel %vm347, %v340, %v344
  %v349 = vand.u32 2147483647, %v324
  %vm350 = vcmp.eq.f32.partialorder %v349, 8.507059e+37
  %v351 = vand.u32 %v324, 2147483648
  %v352 = vor.u32 1.1754944e-38, %v351
  %v353 = vsel %vm350, %v352, %v348
  %v354 = vmul.f32 1.0, %v353
  %v355 = vtanh.pop %v316
  %v356 = vmul.f32 %v339, %v265
  %358 = vrot.lane.b32.xlu0 %v355, 64
  %v359 = vpop.permute.xlu0 %358
  %v361 = vmul.f32 %v339, %v359
  %363 = vrot.lane.b32.xlu0 %v361, 64
  %v364 = vpop.permute.xlu0 %363
  %v366 = vadd.f32 %v356, %v364
  %v367 = vtanh.pop %v366
  %369 = vrot.lane.b32.xlu0 %v367, 64
  %v370 = vpop.permute.xlu0 %369
  %v372 = vmul.f32 %v354, %v370
  %v374 = vsel %vm170, %v372, 0
  %376 = vmatpush.msra.mxu0 0.0
  %377 = vmatpush.msra.mxu0 0.0
  %378 = vmatpush.msra.mxu0 0.0
  %379 = vmatpush.msra.mxu0 0.0
  %380 = vmatpush.msra.mxu0 0.0
  %381 = vmatpush.msra.mxu0 0.0
  %382 = vmatpush.msra.mxu0 0.0
  %383 = vmatpush.msra.mxu0 0.0
  %384 = vmatpush.msra.mxu0 %v168
  %385 = vmatpush.msra.mxu0 %v166
  %386 = vmatpush.msra.mxu0 %v164
  %387 = vmatpush.msra.mxu0 %v162
  %388 = vmatpush.msra.mxu0 %v160
  %389 = vmatpush.msra.mxu0 %v158
  %390 = vmatpush.msra.mxu0 %v156
  %391 = vmatpush.msra.mxu0 %v154
  %392 = vmatmul.f32.gmra.mxu0 %v374
  %v393 = vpop.f32.mrf.mxu0
  %v394 = vadd.f32 0.0, %v393
  %395 = vdwg.mxu0
  %396 = vmatpush.msra.mxu0 0.0
  %397 = vmatpush.msra.mxu0 0.0
  %398 = vmatpush.msra.mxu0 0.0
  %399 = vmatpush.msra.mxu0 0.0
  %400 = vmatpush.msra.mxu0 0.0
  %401 = vmatpush.msra.mxu0 0.0
  %402 = vmatpush.msra.mxu0 0.0
  %403 = vmatpush.msra.mxu0 0.0
  %404 = vmatpush.msra.mxu0 %v169
  %405 = vmatpush.msra.mxu0 %v167
  %406 = vmatpush.msra.mxu0 %v165
  %407 = vmatpush.msra.mxu0 %v163
  %408 = vmatpush.msra.mxu0 %v161
  %409 = vmatpush.msra.mxu0 %v159
  %410 = vmatpush.msra.mxu0 %v157
  %411 = vmatpush.msra.mxu0 %v155
  %412 = vmatmul.f32.gmra.mxu0 %v374
  %v413 = vpop.f32.mrf.mxu0
  %v414 = vadd.f32 0.0, %v413
  %415 = vdwg.mxu0
  %v416 = vadd.f32 %v96, %v394
  %v417 = vadd.f32 %v137, %v414
  %v418 = vxor.u32 %v416, 2147483648
  %v419 = vxor.u32 %v417, 2147483648
  %v420 = vmul.f32 %v418, 1.442695
  %v421 = vpow.pop %v420
  %v422 = vmul.f32 %v419, 1.442695
  %v423 = vpow.pop %v422
  %v424 = vadd.f32 %v421, 1.0
  %v425 = vadd.f32 %v423, 1.0
  %v426 = vrcp.pop %v424
  %v427 = vmul.f32 %v424, %v426
  %v428 = vsub.f32 1.0, %v427
  %v429 = vmul.f32 %v426, %v428
  %v430 = vadd.f32 %v426, %v429
  %vm431 = vweird.f32 %v424
  %vm432 = vweird.f32 %v426
  %vm433 = vmor %vm431, %vm432
  %v434 = vsel %vm433, %v426, %v430
  %v435 = vand.u32 2147483647, %v424
  %vm436 = vcmp.eq.f32.partialorder %v435, 8.507059e+37
  %v437 = vand.u32 %v424, 2147483648
  %v438 = vor.u32 1.1754944e-38, %v437
  %v439 = vsel %vm436, %v438, %v434
  %v440 = vmul.f32 1.0, %v439
  %v441 = vrcp.pop %v425
  %v442 = vmul.f32 %v425, %v441
  %v443 = vsub.f32 1.0, %v442
  %v444 = vmul.f32 %v441, %v443
  %v445 = vadd.f32 %v441, %v444
  %vm446 = vweird.f32 %v425
  %vm447 = vweird.f32 %v441
  %vm448 = vmor %vm446, %vm447
  %v449 = vsel %vm448, %v441, %v445
  %v450 = vand.u32 2147483647, %v425
  %vm451 = vcmp.eq.f32.partialorder %v450, 8.507059e+37
  %v452 = vand.u32 %v425, 2147483648
  %v453 = vor.u32 1.1754944e-38, %v452
  %v454 = vsel %vm451, %v453, %v449
  %v455 = vmul.f32 1.0, %v454
  %v456 = vtanh.pop %v417
  %v457 = vmul.f32 %v440, %v366
  %459 = vrot.lane.b32.xlu0 %v456, 64
  %v460 = vpop.permute.xlu0 %459
  %v462 = vmul.f32 %v440, %v460
  %464 = vrot.lane.b32.xlu0 %v462, 64
  %v465 = vpop.permute.xlu0 %464
  %v467 = vadd.f32 %v457, %v465
  %v468 = vtanh.pop %v467
  %470 = vrot.lane.b32.xlu0 %v468, 64
  %v471 = vpop.permute.xlu0 %470
  %v473 = vmul.f32 %v455, %v471
  %v475 = vsel %vm170, %v473, 0
  %477 = vmatpush.msra.mxu0 0.0
  %478 = vmatpush.msra.mxu0 0.0
  %479 = vmatpush.msra.mxu0 0.0
  %480 = vmatpush.msra.mxu0 0.0
  %481 = vmatpush.msra.mxu0 0.0
  %482 = vmatpush.msra.mxu0 0.0
  %483 = vmatpush.msra.mxu0 0.0
  %484 = vmatpush.msra.mxu0 0.0
  %485 = vmatpush.msra.mxu0 %v168
  %486 = vmatpush.msra.mxu0 %v166
  %487 = vmatpush.msra.mxu0 %v164
  %488 = vmatpush.msra.mxu0 %v162
  %489 = vmatpush.msra.mxu0 %v160
  %490 = vmatpush.msra.mxu0 %v158
  %491 = vmatpush.msra.mxu0 %v156
  %492 = vmatpush.msra.mxu0 %v154
  %493 = vmatmul.f32.gmra.mxu0 %v475
  %v494 = vpop.f32.mrf.mxu0
  %v495 = vadd.f32 0.0, %v494
  %496 = vdwg.mxu0
  %497 = vmatpush.msra.mxu0 0.0
  %498 = vmatpush.msra.mxu0 0.0
  %499 = vmatpush.msra.mxu0 0.0
  %500 = vmatpush.msra.mxu0 0.0
  %501 = vmatpush.msra.mxu0 0.0
  %502 = vmatpush.msra.mxu0 0.0
  %503 = vmatpush.msra.mxu0 0.0
  %504 = vmatpush.msra.mxu0 0.0
  %505 = vmatpush.msra.mxu0 %v169
  %506 = vmatpush.msra.mxu0 %v167
  %507 = vmatpush.msra.mxu0 %v165
  %508 = vmatpush.msra.mxu0 %v163
  %509 = vmatpush.msra.mxu0 %v161
  %510 = vmatpush.msra.mxu0 %v159
  %511 = vmatpush.msra.mxu0 %v157
  %512 = vmatpush.msra.mxu0 %v155
  %513 = vmatmul.f32.gmra.mxu0 %v475
  %v514 = vpop.f32.mrf.mxu0
  %v515 = vadd.f32 0.0, %v514
  %516 = vdwg.mxu0
  %v517 = vadd.f32 %v99, %v495
  %v518 = vadd.f32 %v140, %v515
  %v519 = vxor.u32 %v517, 2147483648
  %v520 = vxor.u32 %v518, 2147483648
  %v521 = vmul.f32 %v519, 1.442695
  %v522 = vpow.pop %v521
  %v523 = vmul.f32 %v520, 1.442695
  %v524 = vpow.pop %v523
  %v525 = vadd.f32 %v522, 1.0
  %v526 = vadd.f32 %v524, 1.0
  %v527 = vrcp.pop %v525
  %v528 = vmul.f32 %v525, %v527
  %v529 = vsub.f32 1.0, %v528
  %v530 = vmul.f32 %v527, %v529
  %v531 = vadd.f32 %v527, %v530
  %vm532 = vweird.f32 %v525
  %vm533 = vweird.f32 %v527
  %vm534 = vmor %vm532, %vm533
  %v535 = vsel %vm534, %v527, %v531
  %v536 = vand.u32 2147483647, %v525
  %vm537 = vcmp.eq.f32.partialorder %v536, 8.507059e+37
  %v538 = vand.u32 %v525, 2147483648
  %v539 = vor.u32 1.1754944e-38, %v538
  %v540 = vsel %vm537, %v539, %v535
  %v541 = vmul.f32 1.0, %v540
  %v542 = vrcp.pop %v526
  %v543 = vmul.f32 %v526, %v542
  %v544 = vsub.f32 1.0, %v543
  %v545 = vmul.f32 %v542, %v544
  %v546 = vadd.f32 %v542, %v545
  %vm547 = vweird.f32 %v526
  %vm548 = vweird.f32 %v542
  %vm549 = vmor %vm547, %vm548
  %v550 = vsel %vm549, %v542, %v546
  %v551 = vand.u32 2147483647, %v526
  %vm552 = vcmp.eq.f32.partialorder %v551, 8.507059e+37
  %v553 = vand.u32 %v526, 2147483648
  %v554 = vor.u32 1.1754944e-38, %v553
  %v555 = vsel %vm552, %v554, %v550
  %v556 = vmul.f32 1.0, %v555
  %v557 = vtanh.pop %v518
  %v558 = vmul.f32 %v541, %v467
  %560 = vrot.lane.b32.xlu0 %v557, 64
  %v561 = vpop.permute.xlu0 %560
  %v563 = vmul.f32 %v541, %v561
  %565 = vrot.lane.b32.xlu0 %v563, 64
  %v566 = vpop.permute.xlu0 %565
  %v568 = vadd.f32 %v558, %v566
  %v569 = vtanh.pop %v568
  %571 = vrot.lane.b32.xlu0 %v569, 64
  %v572 = vpop.permute.xlu0 %571
  %v574 = vmul.f32 %v556, %v572
  %v576 = vsel %vm170, %v574, 0
  %578 = vmatpush.msra.mxu0 0.0
  %579 = vmatpush.msra.mxu0 0.0
  %580 = vmatpush.msra.mxu0 0.0
  %581 = vmatpush.msra.mxu0 0.0
  %582 = vmatpush.msra.mxu0 0.0
  %583 = vmatpush.msra.mxu0 0.0
  %584 = vmatpush.msra.mxu0 0.0
  %585 = vmatpush.msra.mxu0 0.0
  %586 = vmatpush.msra.mxu0 %v168
  %587 = vmatpush.msra.mxu0 %v166
  %588 = vmatpush.msra.mxu0 %v164
  %589 = vmatpush.msra.mxu0 %v162
  %590 = vmatpush.msra.mxu0 %v160
  %591 = vmatpush.msra.mxu0 %v158
  %592 = vmatpush.msra.mxu0 %v156
  %593 = vmatpush.msra.mxu0 %v154
  %594 = vmatmul.f32.gmra.mxu0 %v576
  %v595 = vpop.f32.mrf.mxu0
  %v596 = vadd.f32 0.0, %v595
  %597 = vdwg.mxu0
  %598 = vmatpush.msra.mxu0 0.0
  %599 = vmatpush.msra.mxu0 0.0
  %600 = vmatpush.msra.mxu0 0.0
  %601 = vmatpush.msra.mxu0 0.0
  %602 = vmatpush.msra.mxu0 0.0
  %603 = vmatpush.msra.mxu0 0.0
  %604 = vmatpush.msra.mxu0 0.0
  %605 = vmatpush.msra.mxu0 0.0
  %606 = vmatpush.msra.mxu0 %v169
  %607 = vmatpush.msra.mxu0 %v167
  %608 = vmatpush.msra.mxu0 %v165
  %609 = vmatpush.msra.mxu0 %v163
  %610 = vmatpush.msra.mxu0 %v161
  %611 = vmatpush.msra.mxu0 %v159
  %612 = vmatpush.msra.mxu0 %v157
  %613 = vmatpush.msra.mxu0 %v155
  %614 = vmatmul.f32.gmra.mxu0 %v576
  %v615 = vpop.f32.mrf.mxu0
  %v616 = vadd.f32 0.0, %v615
  %617 = vdwg.mxu0
  %v618 = vadd.f32 %v102, %v596
  %v619 = vadd.f32 %v143, %v616
  %v620 = vxor.u32 %v618, 2147483648
  %v621 = vxor.u32 %v619, 2147483648
  %v622 = vmul.f32 %v620, 1.442695
  %v623 = vpow.pop %v622
  %v624 = vmul.f32 %v621, 1.442695
  %v625 = vpow.pop %v624
  %v626 = vadd.f32 %v623, 1.0
  %v627 = vadd.f32 %v625, 1.0
  %v628 = vrcp.pop %v626
  %v629 = vmul.f32 %v626, %v628
  %v630 = vsub.f32 1.0, %v629
  %v631 = vmul.f32 %v628, %v630
  %v632 = vadd.f32 %v628, %v631
  %vm633 = vweird.f32 %v626
  %vm634 = vweird.f32 %v628
  %vm635 = vmor %vm633, %vm634
  %v636 = vsel %vm635, %v628, %v632
  %v637 = vand.u32 2147483647, %v626
  %vm638 = vcmp.eq.f32.partialorder %v637, 8.507059e+37
  %v639 = vand.u32 %v626, 2147483648
  %v640 = vor.u32 1.1754944e-38, %v639
  %v641 = vsel %vm638, %v640, %v636
  %v642 = vmul.f32 1.0, %v641
  %v643 = vrcp.pop %v627
  %v644 = vmul.f32 %v627, %v643
  %v645 = vsub.f32 1.0, %v644
  %v646 = vmul.f32 %v643, %v645
  %v647 = vadd.f32 %v643, %v646
  %vm648 = vweird.f32 %v627
  %vm649 = vweird.f32 %v643
  %vm650 = vmor %vm648, %vm649
  %v651 = vsel %vm650, %v643, %v647
  %v652 = vand.u32 2147483647, %v627
  %vm653 = vcmp.eq.f32.partialorder %v652, 8.507059e+37
  %v654 = vand.u32 %v627, 2147483648
  %v655 = vor.u32 1.1754944e-38, %v654
  %v656 = vsel %vm653, %v655, %v651
  %v657 = vmul.f32 1.0, %v656
  %v658 = vtanh.pop %v619
  %v659 = vmul.f32 %v642, %v568
  %661 = vrot.lane.b32.xlu0 %v658, 64
  %v662 = vpop.permute.xlu0 %661
  %v664 = vmul.f32 %v642, %v662
  %666 = vrot.lane.b32.xlu0 %v664, 64
  %v667 = vpop.permute.xlu0 %666
  %v669 = vadd.f32 %v659, %v667
  %v670 = vtanh.pop %v669
  %672 = vrot.lane.b32.xlu0 %v670, 64
  %v673 = vpop.permute.xlu0 %672
  %v675 = vmul.f32 %v657, %v673
  %v677 = vsel %vm170, %v675, 0
  %679 = vmatpush.msra.mxu0 0.0
  %680 = vmatpush.msra.mxu0 0.0
  %681 = vmatpush.msra.mxu0 0.0
  %682 = vmatpush.msra.mxu0 0.0
  %683 = vmatpush.msra.mxu0 0.0
  %684 = vmatpush.msra.mxu0 0.0
  %685 = vmatpush.msra.mxu0 0.0
  %686 = vmatpush.msra.mxu0 0.0
  %687 = vmatpush.msra.mxu0 %v168
  %688 = vmatpush.msra.mxu0 %v166
  %689 = vmatpush.msra.mxu0 %v164
  %690 = vmatpush.msra.mxu0 %v162
  %691 = vmatpush.msra.mxu0 %v160
  %692 = vmatpush.msra.mxu0 %v158
  %693 = vmatpush.msra.mxu0 %v156
  %694 = vmatpush.msra.mxu0 %v154
  %695 = vmatmul.f32.gmra.mxu0 %v677
  %v696 = vpop.f32.mrf.mxu0
  %v697 = vadd.f32 0.0, %v696
  %698 = vdwg.mxu0
  %699 = vmatpush.msra.mxu0 0.0
  %700 = vmatpush.msra.mxu0 0.0
  %701 = vmatpush.msra.mxu0 0.0
  %702 = vmatpush.msra.mxu0 0.0
  %703 = vmatpush.msra.mxu0 0.0
  %704 = vmatpush.msra.mxu0 0.0
  %705 = vmatpush.msra.mxu0 0.0
  %706 = vmatpush.msra.mxu0 0.0
  %707 = vmatpush.msra.mxu0 %v169
  %708 = vmatpush.msra.mxu0 %v167
  %709 = vmatpush.msra.mxu0 %v165
  %710 = vmatpush.msra.mxu0 %v163
  %711 = vmatpush.msra.mxu0 %v161
  %712 = vmatpush.msra.mxu0 %v159
  %713 = vmatpush.msra.mxu0 %v157
  %714 = vmatpush.msra.mxu0 %v155
  %715 = vmatmul.f32.gmra.mxu0 %v677
  %v716 = vpop.f32.mrf.mxu0
  %v717 = vadd.f32 0.0, %v716
  %718 = vdwg.mxu0
  %v719 = vadd.f32 %v105, %v697
  %v720 = vadd.f32 %v146, %v717
  %v721 = vxor.u32 %v719, 2147483648
  %v722 = vxor.u32 %v720, 2147483648
  %v723 = vmul.f32 %v721, 1.442695
  %v724 = vpow.pop %v723
  %v725 = vmul.f32 %v722, 1.442695
  %v726 = vpow.pop %v725
  %v727 = vadd.f32 %v724, 1.0
  %v728 = vadd.f32 %v726, 1.0
  %v729 = vrcp.pop %v727
  %v730 = vmul.f32 %v727, %v729
  %v731 = vsub.f32 1.0, %v730
  %v732 = vmul.f32 %v729, %v731
  %v733 = vadd.f32 %v729, %v732
  %vm734 = vweird.f32 %v727
  %vm735 = vweird.f32 %v729
  %vm736 = vmor %vm734, %vm735
  %v737 = vsel %vm736, %v729, %v733
  %v738 = vand.u32 2147483647, %v727
  %vm739 = vcmp.eq.f32.partialorder %v738, 8.507059e+37
  %v740 = vand.u32 %v727, 2147483648
  %v741 = vor.u32 1.1754944e-38, %v740
  %v742 = vsel %vm739, %v741, %v737
  %v743 = vmul.f32 1.0, %v742
  %v744 = vrcp.pop %v728
  %v745 = vmul.f32 %v728, %v744
  %v746 = vsub.f32 1.0, %v745
  %v747 = vmul.f32 %v744, %v746
  %v748 = vadd.f32 %v744, %v747
  %vm749 = vweird.f32 %v728
  %vm750 = vweird.f32 %v744
  %vm751 = vmor %vm749, %vm750
  %v752 = vsel %vm751, %v744, %v748
  %v753 = vand.u32 2147483647, %v728
  %vm754 = vcmp.eq.f32.partialorder %v753, 8.507059e+37
  %v755 = vand.u32 %v728, 2147483648
  %v756 = vor.u32 1.1754944e-38, %v755
  %v757 = vsel %vm754, %v756, %v752
  %v758 = vmul.f32 1.0, %v757
  %v759 = vtanh.pop %v720
  %v760 = vmul.f32 %v743, %v669
  %762 = vrot.lane.b32.xlu0 %v759, 64
  %v763 = vpop.permute.xlu0 %762
  %v765 = vmul.f32 %v743, %v763
  %767 = vrot.lane.b32.xlu0 %v765, 64
  %v768 = vpop.permute.xlu0 %767
  %v770 = vadd.f32 %v760, %v768
  %v771 = vtanh.pop %v770
  %773 = vrot.lane.b32.xlu0 %v771, 64
  %v774 = vpop.permute.xlu0 %773
  %v776 = vmul.f32 %v758, %v774
  %v778 = vsel %vm170, %v776, 0
  %780 = vmatpush.msra.mxu0 0.0
  %781 = vmatpush.msra.mxu0 0.0
  %782 = vmatpush.msra.mxu0 0.0
  %783 = vmatpush.msra.mxu0 0.0
  %784 = vmatpush.msra.mxu0 0.0
  %785 = vmatpush.msra.mxu0 0.0
  %786 = vmatpush.msra.mxu0 0.0
  %787 = vmatpush.msra.mxu0 0.0
  %788 = vmatpush.msra.mxu0 %v168
  %789 = vmatpush.msra.mxu0 %v166
  %790 = vmatpush.msra.mxu0 %v164
  %791 = vmatpush.msra.mxu0 %v162
  %792 = vmatpush.msra.mxu0 %v160
  %793 = vmatpush.msra.mxu0 %v158
  %794 = vmatpush.msra.mxu0 %v156
  %795 = vmatpush.msra.mxu0 %v154
  %796 = vmatmul.f32.gmra.mxu0 %v778
  %v797 = vpop.f32.mrf.mxu0
  %v798 = vadd.f32 0.0, %v797
  %799 = vdwg.mxu0
  %800 = vmatpush.msra.mxu0 0.0
  %801 = vmatpush.msra.mxu0 0.0
  %802 = vmatpush.msra.mxu0 0.0
  %803 = vmatpush.msra.mxu0 0.0
  %804 = vmatpush.msra.mxu0 0.0
  %805 = vmatpush.msra.mxu0 0.0
  %806 = vmatpush.msra.mxu0 0.0
  %807 = vmatpush.msra.mxu0 0.0
  %808 = vmatpush.msra.mxu0 %v169
  %809 = vmatpush.msra.mxu0 %v167
  %810 = vmatpush.msra.mxu0 %v165
  %811 = vmatpush.msra.mxu0 %v163
  %812 = vmatpush.msra.mxu0 %v161
  %813 = vmatpush.msra.mxu0 %v159
  %814 = vmatpush.msra.mxu0 %v157
  %815 = vmatpush.msra.mxu0 %v155
  %816 = vmatmul.f32.gmra.mxu0 %v778
  %v817 = vpop.f32.mrf.mxu0
  %v818 = vadd.f32 0.0, %v817
  %819 = vdwg.mxu0
  %v820 = vadd.f32 %v108, %v798
  %v821 = vadd.f32 %v149, %v818
  %v822 = vxor.u32 %v820, 2147483648
  %v823 = vxor.u32 %v821, 2147483648
  %v824 = vmul.f32 %v822, 1.442695
  %v825 = vpow.pop %v824
  %v826 = vmul.f32 %v823, 1.442695
  %v827 = vpow.pop %v826
  %v828 = vadd.f32 %v825, 1.0
  %v829 = vadd.f32 %v827, 1.0
  %v830 = vrcp.pop %v828
  %v831 = vmul.f32 %v828, %v830
  %v832 = vsub.f32 1.0, %v831
  %v833 = vmul.f32 %v830, %v832
  %v834 = vadd.f32 %v830, %v833
  %vm835 = vweird.f32 %v828
  %vm836 = vweird.f32 %v830
  %vm837 = vmor %vm835, %vm836
  %v838 = vsel %vm837, %v830, %v834
  %v839 = vand.u32 2147483647, %v828
  %vm840 = vcmp.eq.f32.partialorder %v839, 8.507059e+37
  %v841 = vand.u32 %v828, 2147483648
  %v842 = vor.u32 1.1754944e-38, %v841
  %v843 = vsel %vm840, %v842, %v838
  %v844 = vmul.f32 1.0, %v843
  %v845 = vrcp.pop %v829
  %v846 = vmul.f32 %v829, %v845
  %v847 = vsub.f32 1.0, %v846
  %v848 = vmul.f32 %v845, %v847
  %v849 = vadd.f32 %v845, %v848
  %vm850 = vweird.f32 %v829
  %vm851 = vweird.f32 %v845
  %vm852 = vmor %vm850, %vm851
  %v853 = vsel %vm852, %v845, %v849
  %v854 = vand.u32 2147483647, %v829
  %vm855 = vcmp.eq.f32.partialorder %v854, 8.507059e+37
  %v856 = vand.u32 %v829, 2147483648
  %v857 = vor.u32 1.1754944e-38, %v856
  %v858 = vsel %vm855, %v857, %v853
  %v859 = vmul.f32 1.0, %v858
  %v860 = vtanh.pop %v821
  %v861 = vmul.f32 %v844, %v770
  %863 = vrot.lane.b32.xlu0 %v860, 64
  %v864 = vpop.permute.xlu0 %863
  %v866 = vmul.f32 %v844, %v864
  %868 = vrot.lane.b32.xlu0 %v866, 64
  %v869 = vpop.permute.xlu0 %868
  %v871 = vadd.f32 %v861, %v869
  %v872 = vtanh.pop %v871
  %874 = vrot.lane.b32.xlu0 %v872, 64
  %v875 = vpop.permute.xlu0 %874
  %v877 = vmul.f32 %v859, %v875
  %v879 = vsel %vm170, %v877, 0
  %881 = vmatpush.msra.mxu0 0.0
  %882 = vmatpush.msra.mxu0 0.0
  %883 = vmatpush.msra.mxu0 0.0
  %884 = vmatpush.msra.mxu0 0.0
  %885 = vmatpush.msra.mxu0 0.0
  %886 = vmatpush.msra.mxu0 0.0
  %887 = vmatpush.msra.mxu0 0.0
  %888 = vmatpush.msra.mxu0 0.0
  %889 = vmatpush.msra.mxu0 %v168
  %890 = vmatpush.msra.mxu0 %v166
  %891 = vmatpush.msra.mxu0 %v164
  %892 = vmatpush.msra.mxu0 %v162
  %893 = vmatpush.msra.mxu0 %v160
  %894 = vmatpush.msra.mxu0 %v158
  %895 = vmatpush.msra.mxu0 %v156
  %896 = vmatpush.msra.mxu0 %v154
  %897 = vmatmul.f32.gmra.mxu0 %v879
  %v898 = vpop.f32.mrf.mxu0
  %v899 = vadd.f32 0.0, %v898
  %900 = vdwg.mxu0
  %901 = vmatpush.msra.mxu0 0.0
  %902 = vmatpush.msra.mxu0 0.0
  %903 = vmatpush.msra.mxu0 0.0
  %904 = vmatpush.msra.mxu0 0.0
  %905 = vmatpush.msra.mxu0 0.0
  %906 = vmatpush.msra.mxu0 0.0
  %907 = vmatpush.msra.mxu0 0.0
  %908 = vmatpush.msra.mxu0 0.0
  %909 = vmatpush.msra.mxu0 %v169
  %910 = vmatpush.msra.mxu0 %v167
  %911 = vmatpush.msra.mxu0 %v165
  %912 = vmatpush.msra.mxu0 %v163
  %913 = vmatpush.msra.mxu0 %v161
  %914 = vmatpush.msra.mxu0 %v159
  %915 = vmatpush.msra.mxu0 %v157
  %916 = vmatpush.msra.mxu0 %v155
  %917 = vmatmul.f32.gmra.mxu0 %v879
  %v918 = vpop.f32.mrf.mxu0
  %v919 = vadd.f32 0.0, %v918
  %920 = vdwg.mxu0
  %v921 = vadd.f32 %v111, %v899
  %v922 = vadd.f32 %v152, %v919
  %v923 = vxor.u32 %v921, 2147483648
  %v924 = vxor.u32 %v922, 2147483648
  %v925 = vmul.f32 %v923, 1.442695
  %v926 = vpow.pop %v925
  %v927 = vmul.f32 %v924, 1.442695
  %v928 = vpow.pop %v927
  %v929 = vadd.f32 %v926, 1.0
  %v930 = vadd.f32 %v928, 1.0
  %v931 = vrcp.pop %v929
  %v932 = vmul.f32 %v929, %v931
  %v933 = vsub.f32 1.0, %v932
  %v934 = vmul.f32 %v931, %v933
  %v935 = vadd.f32 %v931, %v934
  %vm936 = vweird.f32 %v929
  %vm937 = vweird.f32 %v931
  %vm938 = vmor %vm936, %vm937
  %v939 = vsel %vm938, %v931, %v935
  %v940 = vand.u32 2147483647, %v929
  %vm941 = vcmp.eq.f32.partialorder %v940, 8.507059e+37
  %v942 = vand.u32 %v929, 2147483648
  %v943 = vor.u32 1.1754944e-38, %v942
  %v944 = vsel %vm941, %v943, %v939
  %v945 = vmul.f32 1.0, %v944
  %v946 = vrcp.pop %v930
  %v947 = vmul.f32 %v930, %v946
  %v948 = vsub.f32 1.0, %v947
  %v949 = vmul.f32 %v946, %v948
  %v950 = vadd.f32 %v946, %v949
  %vm951 = vweird.f32 %v930
  %vm952 = vweird.f32 %v946
  %vm953 = vmor %vm951, %vm952
  %v954 = vsel %vm953, %v946, %v950
  %v955 = vand.u32 2147483647, %v930
  %vm956 = vcmp.eq.f32.partialorder %v955, 8.507059e+37
  %v957 = vand.u32 %v930, 2147483648
  %v958 = vor.u32 1.1754944e-38, %v957
  %v959 = vsel %vm956, %v958, %v954
  %v960 = vmul.f32 1.0, %v959
  %v961 = vtanh.pop %v922
  %v962 = vmul.f32 %v945, %v871
  %964 = vrot.lane.b32.xlu0 %v961, 64
  %v965 = vpop.permute.xlu0 %964
  %v967 = vmul.f32 %v945, %v965
  %969 = vrot.lane.b32.xlu0 %v967, 64
  %v970 = vpop.permute.xlu0 %969
  %v972 = vadd.f32 %v962, %v970
  %v973 = vtanh.pop %v972
  %975 = vrot.lane.b32.xlu0 %v973, 64
  %v976 = vpop.permute.xlu0 %975
  %v978 = vmul.f32 %v960, %v976
  %v979 = vld [vmem:[%s4] sm:$0xff]
  %v980 = vld [vmem:[%s4 + $0x8] sm:$0xff]
  %v981 = vld [vmem:[%s4 + $0x10] sm:$0xff]
  %v982 = vld [vmem:[%s4 + $0x18] sm:$0xff]
  %v983 = vld [vmem:[%s4 + $0x20] sm:$0xff]
  %v984 = vld [vmem:[%s4 + $0x28] sm:$0xff]
  %v985 = vld [vmem:[%s4 + $0x30] sm:$0xff]
  %v986 = vld [vmem:[%s4 + $0x38] sm:$0xff]
  %v987 = vld [vmem:[%s5] sm:$0x1]
  %v989 = vperm.slane %v987, 0
  %v992 = vsel %vm170, %v978, 0
  %994 = vmatpush.msra.mxu0 0.0
  %995 = vmatpush.msra.mxu0 0.0
  %996 = vmatpush.msra.mxu0 0.0
  %997 = vmatpush.msra.mxu0 0.0
  %998 = vmatpush.msra.mxu0 0.0
  %999 = vmatpush.msra.mxu0 0.0
  %1000 = vmatpush.msra.mxu0 0.0
  %1001 = vmatpush.msra.mxu0 0.0
  %1002 = vmatpush.msra.mxu0 %v986
  %1003 = vmatpush.msra.mxu0 %v985
  %1004 = vmatpush.msra.mxu0 %v984
  %1005 = vmatpush.msra.mxu0 %v983
  %1006 = vmatpush.msra.mxu0 %v982
  %1007 = vmatpush.msra.mxu0 %v981
  %1008 = vmatpush.msra.mxu0 %v980
  %1009 = vmatpush.msra.mxu0 %v979
  %1010 = vmatmul.f32.gmra.mxu0 %v992
  %v1011 = vpop.f32.mrf.mxu0
  %v1012 = vadd.f32 %v989, %v1011
  %1013 = vdwg.mxu0
  %1014 = vst [vmem:[%s6] sm:$0xff] %v1012
  // Predicated region
  $region26: #{controller_forward.1} parent=0 // pred_check
    _
  $region27: #{controller_forward.1} parent=0 // pred_check_branch
    %1016 = sbr.rel (0) target = $region29
  $region28: #{controller_forward.1} parent=0 // pred_region
    _
  $region29: #{controller_forward.1} parent=0 // pred_fallthru
    _
  // Predicated region
  $region30: #{controller_forward.1} parent=0 // pred_check
    _
  $region31: #{controller_forward.1} parent=0 // pred_check_branch
    %1018 = sbr.rel (0) target = $region33
  $region32: #{controller_forward.1} parent=0 // pred_region
    _
  $region33: #{controller_forward.1} parent=0 // pred_fallthru
    _

</llo_original>
